<compile_context>
chip_gen: v6e
topology: v6e:2x2x1
jax: 0.10.0
libtpu: 0.0.40
codegen_flags: <defaults>
</compile_context>

<pallas_src>
import jax
import jax.numpy as jnp
from jax.experimental import pallas as pl
from jax.experimental.pallas import tpu as pltpu


def _make_kernel(n_br, c_in, c_out, k_max, tl):
    inv_c = 1.0 / float(c_out)

    def kernel(x_ref, w_ref, b_ref, g_ref, be_ref, o_ref, s_ref):
        # x_ref block: (1, 1, C_in, TL + k_max - 1)  -- input tile with halo.
        # Build the stacked shifted operand S: row band d holds the window shifted by d.
        for d in range(k_max):
            s_ref[d * c_in:(d + 1) * c_in, :] = x_ref[0, 0, :, d:d + tl]

        # One fused MXU matmul for all taps of all branches
        # (contraction depth k_max*C_in; output rows = n_br*C_out).
        y = jnp.dot(w_ref[...], s_ref[...], preferred_element_type=jnp.float32)
        y = y + b_ref[...]                          # (n_br*C_out, TL) + (n_br*C_out, 1)

        g = g_ref[...]
        be = be_ref[...]
        for br in range(n_br):                      # static, unrolled; 2-D ops only
            lo, hi = br * c_out, (br + 1) * c_out
            yb = y[lo:hi, :]                        # (C_out, TL) f32

            # One-pass LayerNorm statistics over the channel (sublane) axis, eps=1e-5.
            s1 = jnp.sum(yb, axis=0, keepdims=True)
            s2 = jnp.sum(yb * yb, axis=0, keepdims=True)
            mean = s1 * inv_c
            var = jnp.maximum(s2 * inv_c - mean * mean, 0.0)
            inv = jax.lax.rsqrt(var + 1e-5)
            yn = (yb - mean) * inv * g[lo:hi, :] + be[lo:hi, :]

            # Mish with a single exp:  y*tanh(softplus(y)) = y*e*(e+2)/(e*(e+2)+2).
            e = jnp.exp(jnp.minimum(yn, 20.0))
            num = e * (e + 2.0)
            mish = yn * (num / (num + 2.0))

            o_ref[0, lo:hi, :] = mish.astype(o_ref.dtype)

    return kernel


def multi_scale_cnn_block(x, weights, biases, gammas, betas,
                          kernel_sizes=(3, 5, 7), max_l_tile=512):
    """x: (B, C_in, L) (PyTorch Conv1d layout).
    weights[i]: (C_out, C_in, K_i); biases/gammas/betas[i]: (C_out,).
    Returns (B, len(kernel_sizes) * C_out, L), matching the PyTorch module."""
    assert all(k % 2 == 1 for k in kernel_sizes), "same-padding math requires odd kernel sizes"
    B, c_in, L = x.shape
    n_br = len(kernel_sizes)
    c_out = weights[0].shape[0]
    k_max = max(kernel_sizes)
    max_pad = (k_max - 1) // 2

    # --- L tiling: whole-L for short sequences, 128-multiple tiles otherwise. ---
    if L <= max_l_tile:
        tl, n_t = L, 1
    else:
        tl = max_l_tile                        # multiple of 128
        n_t = (L + tl - 1) // tl
    l_pad = tl * n_t
    w_halo = tl + 2 * max_pad

    # Halo-carrying slab view of the input: (B, nT, C_in, TL + 2*max_pad).
    x_pad = jnp.pad(x, ((0, 0), (0, 0), (max_pad, max_pad + (l_pad - L))))
    if n_t == 1:
        slab = x_pad[:, None, :, :]
    else:
        idx = jnp.arange(n_t)[:, None] * tl + jnp.arange(w_halo)[None, :]
        slab = jnp.transpose(x_pad[:, :, idx], (0, 2, 1, 3))

    # Fused weight matrix: branch br occupies rows [br*C_out, (br+1)*C_out) and its
    # taps are centered inside the shared K_max-wide tap band (zero elsewhere).
    rows = []
    for w, k in zip(weights, kernel_sizes):
        p = (k - 1) // 2
        flat = jnp.transpose(w, (0, 2, 1)).reshape(c_out, k * c_in)   # [co, t*C_in+ci]
        off = (max_pad - p) * c_in
        rows.append(jnp.pad(flat, ((0, 0), (off, off))))
    w_fused = jnp.concatenate(rows, axis=0).astype(x.dtype)           # (3*C_out, 7*C_in)

    b_s = jnp.concatenate(biases).reshape(n_br * c_out, 1).astype(jnp.float32)
    g_s = jnp.concatenate(gammas).reshape(n_br * c_out, 1).astype(jnp.float32)
    be_s = jnp.concatenate(betas).reshape(n_br * c_out, 1).astype(jnp.float32)

    kernel = _make_kernel(n_br, c_in, c_out, k_max, tl)

    # Explicit scoped-VMEM budget sized to the tiles (review: don't rely on defaults).
    itemsize = x.dtype.itemsize
    in_tile = c_in * w_halo * itemsize
    out_tile = n_br * c_out * tl * itemsize
    s_tile = k_max * c_in * tl * itemsize
    f32_tmp = 6 * n_br * c_out * tl * 4
    vmem_need = 2 * (in_tile + out_tile) + s_tile + f32_tmp + 2 * w_fused.size * itemsize
    vmem_limit = int(min(max(2 * vmem_need, 32 * 1024 * 1024), 64 * 1024 * 1024))

    out = pl.pallas_call(
        kernel,
        out_shape=jax.ShapeDtypeStruct((B, n_br * c_out, l_pad), x.dtype),
        grid_spec=pltpu.PrefetchScalarGridSpec(
            num_scalar_prefetch=0,
            grid=(B, n_t),
            in_specs=[
                pl.BlockSpec((1, 1, c_in, w_halo), lambda b, t: (b, t, 0, 0)),
                pl.BlockSpec((n_br * c_out, k_max * c_in), lambda b, t: (0, 0)),
                pl.BlockSpec((n_br * c_out, 1), lambda b, t: (0, 0)),
                pl.BlockSpec((n_br * c_out, 1), lambda b, t: (0, 0)),
                pl.BlockSpec((n_br * c_out, 1), lambda b, t: (0, 0)),
            ],
            out_specs=pl.BlockSpec((1, n_br * c_out, tl), lambda b, t: (b, 0, t)),
            scratch_shapes=[pltpu.VMEM((k_max * c_in, tl), x.dtype)],
        ),
        compiler_params=pltpu.CompilerParams(
            dimension_semantics=("parallel", "parallel"),
            vmem_limit_bytes=vmem_limit,
        ),
    )(slab, w_fused, b_s, g_s, be_s)

    return out if l_pad == L else out[:, :, :L]


if __name__ == "__main__":
    B, C_in, C_out, L = 2, 4, 4, 16
    kernel_sizes = (3, 5, 7)

    key = jax.random.PRNGKey(0)
    keys = jax.random.split(key, 1 + 4 * len(kernel_sizes))
    x = jax.random.normal(keys[0], (B, C_in, L), dtype=jnp.float32)

    weights, biases, gammas, betas = [], [], [], []
    for i, k_sz in enumerate(kernel_sizes):
        fan_in = C_in * k_sz
        bound = 1.0 / (fan_in ** 0.5)            # PyTorch-style uniform init bound
        kw, kb, kg, kbe = keys[1 + 4 * i: 5 + 4 * i]
        weights.append(jax.random.uniform(kw, (C_out, C_in, k_sz), jnp.float32, -bound, bound))
        biases.append(jax.random.uniform(kb, (C_out,), jnp.float32, -bound, bound))
        gammas.append(1.0 + 0.1 * jax.random.normal(kg, (C_out,), jnp.float32))
        betas.append(0.1 * jax.random.normal(kbe, (C_out,), jnp.float32))

    out = multi_scale_cnn_block(x, weights, biases, gammas, betas, kernel_sizes)
    jax.block_until_ready(out)

    # Pure-JAX reference (conv1d -> LN over channels -> Mish per branch, concat).
    def _ref(x, weights, biases, gammas, betas, kernel_sizes):
        outs = []
        for w, b, g, be, k_sz in zip(weights, biases, gammas, betas, kernel_sizes):
            p = (k_sz - 1) // 2
            y = jax.lax.conv_general_dilated(
                x, w, window_strides=(1,), padding=((p, p),),
                dimension_numbers=("NCH", "OIH", "NCH"))
            y = y + b[None, :, None]
            yt = jnp.transpose(y, (0, 2, 1))
            mu = jnp.mean(yt, -1, keepdims=True)
            var = jnp.mean((yt - mu) ** 2, -1, keepdims=True)
            yt = (yt - mu) * jax.lax.rsqrt(var + 1e-5) * g + be
            y = jnp.transpose(yt, (0, 2, 1))
            outs.append(y * jnp.tanh(jnp.logaddexp(y, 0.0)))
        return jnp.concatenate(outs, axis=1)

    ref = _ref(x, weights, biases, gammas, betas, kernel_sizes)
    assert out.shape == (B, len(kernel_sizes) * C_out, L), out.shape
    err = float(jnp.max(jnp.abs(out - ref)))
    assert jnp.allclose(out, ref, atol=2e-4, rtol=2e-4), err

    print("KERNEL_OK")
</pallas_src>

<mosaic_0001>
module attributes {stable_mosaic.version = 11 : i64} {
  func.func @kernel(%arg0: i32, %arg1: i32, %arg2: memref<1x1x4x22xf32, #tpu.memory_space<vmem>>, %arg3: memref<12x28xf32, #tpu.memory_space<vmem>>, %arg4: memref<12x1xf32, #tpu.memory_space<vmem>>, %arg5: memref<12x1xf32, #tpu.memory_space<vmem>>, %arg6: memref<12x1xf32, #tpu.memory_space<vmem>>, %arg7: memref<1x12x16xf32, #tpu.memory_space<vmem>>, %arg8: memref<28x16xf32, #tpu.memory_space<vmem>>) attributes {dimension_semantics = [#tpu.dimension_semantics<parallel>, #tpu.dimension_semantics<parallel>], iteration_bounds = array<i64: 2, 1>, scalar_prefetch = 0 : i64, scratch_operands = 1 : i64, tpu.core_type = #tpu.core_type<tc>, window_params = [{transform_indices = @transform_0, window_bounds = array<i64: 1, 1, 4, 22>}, {pipeline_mode = #tpu.pipeline_mode<synchronous>, transform_indices = @transform_1, window_bounds = array<i64: 12, 28>}, {pipeline_mode = #tpu.pipeline_mode<synchronous>, transform_indices = @transform_2, window_bounds = array<i64: 12, 1>}, {pipeline_mode = #tpu.pipeline_mode<synchronous>, transform_indices = @transform_3, window_bounds = array<i64: 12, 1>}, {pipeline_mode = #tpu.pipeline_mode<synchronous>, transform_indices = @transform_4, window_bounds = array<i64: 12, 1>}, {transform_indices = @transform_5, window_bounds = array<i64: 1, 12, 16>}]} {
    %c0 = arith.constant 0 : index
    %c0_0 = arith.constant 0 : index
    %c0_1 = arith.constant 0 : index
    %c0_2 = arith.constant 0 : index
    %0 = vector.load %arg2[%c0, %c0_0, %c0_1, %c0_2] : memref<1x1x4x22xf32, #tpu.memory_space<vmem>>, vector<1x1x4x16xf32>
    %1 = vector.shape_cast %0 : vector<1x1x4x16xf32> to vector<4x16xf32>
    %c0_3 = arith.constant 0 : index
    %c0_4 = arith.constant 0 : index
    %2 = vector.load %arg8[%c0_3, %c0_4] : memref<28x16xf32, #tpu.memory_space<vmem>>, vector<4x16xf32>
    tpu.vector_store %arg8[%c0_3, %c0_4], %1 {strides = array<i32>} : memref<28x16xf32, #tpu.memory_space<vmem>>, vector<4x16xf32>,
    %c0_5 = arith.constant 0 : index
    %c0_6 = arith.constant 0 : index
    %c0_7 = arith.constant 0 : index
    %c1 = arith.constant 1 : index
    %3 = vector.load %arg2[%c0_5, %c0_6, %c0_7, %c1] : memref<1x1x4x22xf32, #tpu.memory_space<vmem>>, vector<1x1x4x16xf32>
    %4 = vector.shape_cast %3 : vector<1x1x4x16xf32> to vector<4x16xf32>
    %c4 = arith.constant 4 : index
    %c0_8 = arith.constant 0 : index
    %5 = vector.load %arg8[%c4, %c0_8] : memref<28x16xf32, #tpu.memory_space<vmem>>, vector<4x16xf32>
    tpu.vector_store %arg8[%c4, %c0_8], %4 {strides = array<i32>} : memref<28x16xf32, #tpu.memory_space<vmem>>, vector<4x16xf32>,
    %c0_9 = arith.constant 0 : index
    %c0_10 = arith.constant 0 : index
    %c0_11 = arith.constant 0 : index
    %c2 = arith.constant 2 : index
    %6 = vector.load %arg2[%c0_9, %c0_10, %c0_11, %c2] : memref<1x1x4x22xf32, #tpu.memory_space<vmem>>, vector<1x1x4x16xf32>
    %7 = vector.shape_cast %6 : vector<1x1x4x16xf32> to vector<4x16xf32>
    %c8 = arith.constant 8 : index
    %c0_12 = arith.constant 0 : index
    %8 = vector.load %arg8[%c8, %c0_12] : memref<28x16xf32, #tpu.memory_space<vmem>>, vector<4x16xf32>
    tpu.vector_store %arg8[%c8, %c0_12], %7 {strides = array<i32>} : memref<28x16xf32, #tpu.memory_space<vmem>>, vector<4x16xf32>,
    %c0_13 = arith.constant 0 : index
    %c0_14 = arith.constant 0 : index
    %c0_15 = arith.constant 0 : index
    %c3 = arith.constant 3 : index
    %9 = vector.load %arg2[%c0_13, %c0_14, %c0_15, %c3] : memref<1x1x4x22xf32, #tpu.memory_space<vmem>>, vector<1x1x4x16xf32>
    %10 = vector.shape_cast %9 : vector<1x1x4x16xf32> to vector<4x16xf32>
    %c12 = arith.constant 12 : index
    %c0_16 = arith.constant 0 : index
    %11 = vector.load %arg8[%c12, %c0_16] : memref<28x16xf32, #tpu.memory_space<vmem>>, vector<4x16xf32>
    tpu.vector_store %arg8[%c12, %c0_16], %10 {strides = array<i32>} : memref<28x16xf32, #tpu.memory_space<vmem>>, vector<4x16xf32>,
    %c0_17 = arith.constant 0 : index
    %c0_18 = arith.constant 0 : index
    %c0_19 = arith.constant 0 : index
    %c4_20 = arith.constant 4 : index
    %12 = vector.load %arg2[%c0_17, %c0_18, %c0_19, %c4_20] : memref<1x1x4x22xf32, #tpu.memory_space<vmem>>, vector<1x1x4x16xf32>
    %13 = vector.shape_cast %12 : vector<1x1x4x16xf32> to vector<4x16xf32>
    %c16 = arith.constant 16 : index
    %c0_21 = arith.constant 0 : index
    %14 = vector.load %arg8[%c16, %c0_21] : memref<28x16xf32, #tpu.memory_space<vmem>>, vector<4x16xf32>
    tpu.vector_store %arg8[%c16, %c0_21], %13 {strides = array<i32>} : memref<28x16xf32, #tpu.memory_space<vmem>>, vector<4x16xf32>,
    %c0_22 = arith.constant 0 : index
    %c0_23 = arith.constant 0 : index
    %c0_24 = arith.constant 0 : index
    %c5 = arith.constant 5 : index
    %15 = vector.load %arg2[%c0_22, %c0_23, %c0_24, %c5] : memref<1x1x4x22xf32, #tpu.memory_space<vmem>>, vector<1x1x4x16xf32>
    %16 = vector.shape_cast %15 : vector<1x1x4x16xf32> to vector<4x16xf32>
    %c20 = arith.constant 20 : index
    %c0_25 = arith.constant 0 : index
    %17 = vector.load %arg8[%c20, %c0_25] : memref<28x16xf32, #tpu.memory_space<vmem>>, vector<4x16xf32>
    tpu.vector_store %arg8[%c20, %c0_25], %16 {strides = array<i32>} : memref<28x16xf32, #tpu.memory_space<vmem>>, vector<4x16xf32>,
    %c0_26 = arith.constant 0 : index
    %c0_27 = arith.constant 0 : index
    %c0_28 = arith.constant 0 : index
    %c6 = arith.constant 6 : index
    %18 = vector.load %arg2[%c0_26, %c0_27, %c0_28, %c6] : memref<1x1x4x22xf32, #tpu.memory_space<vmem>>, vector<1x1x4x16xf32>
    %19 = vector.shape_cast %18 : vector<1x1x4x16xf32> to vector<4x16xf32>
    %c24 = arith.constant 24 : index
    %c0_29 = arith.constant 0 : index
    %20 = vector.load %arg8[%c24, %c0_29] : memref<28x16xf32, #tpu.memory_space<vmem>>, vector<4x16xf32>
    tpu.vector_store %arg8[%c24, %c0_29], %19 {strides = array<i32>} : memref<28x16xf32, #tpu.memory_space<vmem>>, vector<4x16xf32>,
    %c0_30 = arith.constant 0 : index
    %c0_31 = arith.constant 0 : index
    %21 = vector.load %arg3[%c0_30, %c0_31] : memref<12x28xf32, #tpu.memory_space<vmem>>, vector<12x28xf32>
    %c0_32 = arith.constant 0 : index
    %c0_33 = arith.constant 0 : index
    %22 = vector.load %arg8[%c0_32, %c0_33] : memref<28x16xf32, #tpu.memory_space<vmem>>, vector<28x16xf32>
    %cst = arith.constant dense<0.000000e+00> : vector<12x16xf32>
    %23 = tpu.matmul %21, %22, %cst {dimension_numbers = #tpu.dot_dimension_numbers<[1], [0], [0], [1], [0, 0, 1, 1], [], []>} : vector<12x28xf32>, vector<28x16xf32>, vector<12x16xf32> -> vector<12x16xf32>
    %c0_34 = arith.constant 0 : index
    %c0_35 = arith.constant 0 : index
    %24 = vector.load %arg4[%c0_34, %c0_35] : memref<12x1xf32, #tpu.memory_space<vmem>>, vector<12x1xf32>
    %25 = vector.broadcast %24 : vector<12x1xf32> to vector<12x16xf32>
    %26 = arith.addf %23, %25 : vector<12x16xf32>
    %c0_36 = arith.constant 0 : index
    %c0_37 = arith.constant 0 : index
    %27 = vector.load %arg5[%c0_36, %c0_37] : memref<12x1xf32, #tpu.memory_space<vmem>>, vector<12x1xf32>
    %c0_38 = arith.constant 0 : index
    %c0_39 = arith.constant 0 : index
    %28 = vector.load %arg6[%c0_38, %c0_39] : memref<12x1xf32, #tpu.memory_space<vmem>>, vector<12x1xf32>
    %29 = vector.extract_strided_slice %26 {offsets = [0, 0], sizes = [4, 16], strides = [1, 1]} : vector<12x16xf32> to vector<4x16xf32>
    %cst_40 = arith.constant dense<0.000000e+00> : vector<16xf32>
    %30 = vector.multi_reduction <add>, %29, %cst_40 [0] : vector<4x16xf32> to vector<16xf32>
    %31 = vector.shape_cast %30 : vector<16xf32> to vector<1x16xf32>
    %32 = arith.mulf %29, %29 : vector<4x16xf32>
    %cst_41 = arith.constant dense<0.000000e+00> : vector<16xf32>
    %33 = vector.multi_reduction <add>, %32, %cst_41 [0] : vector<4x16xf32> to vector<16xf32>
    %34 = vector.shape_cast %33 : vector<16xf32> to vector<1x16xf32>
    %cst_42 = arith.constant 2.500000e-01 : f32
    %35 = vector.broadcast %cst_42 : f32 to vector<1x16xf32>
    %36 = arith.mulf %31, %35 : vector<1x16xf32>
    %cst_43 = arith.constant 2.500000e-01 : f32
    %37 = vector.broadcast %cst_43 : f32 to vector<1x16xf32>
    %38 = arith.mulf %34, %37 : vector<1x16xf32>
    %39 = arith.mulf %36, %36 : vector<1x16xf32>
    %40 = arith.subf %38, %39 : vector<1x16xf32>
    %cst_44 = arith.constant 0.000000e+00 : f32
    %41 = vector.broadcast %cst_44 : f32 to vector<1x16xf32>
    %42 = arith.maximumf %40, %41 : vector<1x16xf32>
    %cst_45 = arith.constant 9.99999974E-6 : f32
    %43 = vector.broadcast %cst_45 : f32 to vector<1x16xf32>
    %44 = arith.addf %42, %43 : vector<1x16xf32>
    %45 = math.rsqrt %44 : vector<1x16xf32>
    %46 = vector.broadcast %36 : vector<1x16xf32> to vector<4x16xf32>
    %47 = arith.subf %29, %46 : vector<4x16xf32>
    %48 = vector.broadcast %45 : vector<1x16xf32> to vector<4x16xf32>
    %49 = arith.mulf %47, %48 : vector<4x16xf32>
    %50 = vector.extract_strided_slice %27 {offsets = [0, 0], sizes = [4, 1], strides = [1, 1]} : vector<12x1xf32> to vector<4x1xf32>
    %51 = vector.broadcast %50 : vector<4x1xf32> to vector<4x16xf32>
    %52 = arith.mulf %49, %51 : vector<4x16xf32>
    %53 = vector.extract_strided_slice %28 {offsets = [0, 0], sizes = [4, 1], strides = [1, 1]} : vector<12x1xf32> to vector<4x1xf32>
    %54 = vector.broadcast %53 : vector<4x1xf32> to vector<4x16xf32>
    %55 = arith.addf %52, %54 : vector<4x16xf32>
    %cst_46 = arith.constant 2.000000e+01 : f32
    %56 = vector.broadcast %cst_46 : f32 to vector<4x16xf32>
    %57 = arith.minimumf %55, %56 : vector<4x16xf32>
    %58 = math.exp %57 : vector<4x16xf32>
    %cst_47 = arith.constant 2.000000e+00 : f32
    %59 = vector.broadcast %cst_47 : f32 to vector<4x16xf32>
    %60 = arith.addf %58, %59 : vector<4x16xf32>
    %61 = arith.mulf %58, %60 : vector<4x16xf32>
    %cst_48 = arith.constant 2.000000e+00 : f32
    %62 = vector.broadcast %cst_48 : f32 to vector<4x16xf32>
    %63 = arith.addf %61, %62 : vector<4x16xf32>
    %64 = arith.divf %61, %63 : vector<4x16xf32>
    %65 = arith.mulf %55, %64 : vector<4x16xf32>
    %c0_49 = arith.constant 0 : index
    %c0_50 = arith.constant 0 : index
    %c0_51 = arith.constant 0 : index
    %66 = vector.load %arg7[%c0_49, %c0_50, %c0_51] : memref<1x12x16xf32, #tpu.memory_space<vmem>>, vector<1x4x16xf32>
    %67 = vector.shape_cast %66 : vector<1x4x16xf32> to vector<4x16xf32>
    %68 = vector.shape_cast %65 : vector<4x16xf32> to vector<1x4x16xf32>
    tpu.vector_store %arg7[%c0_49, %c0_50, %c0_51], %68 {strides = array<i32>} : memref<1x12x16xf32, #tpu.memory_space<vmem>>, vector<1x4x16xf32>,
    %69 = vector.extract_strided_slice %26 {offsets = [4, 0], sizes = [4, 16], strides = [1, 1]} : vector<12x16xf32> to vector<4x16xf32>
    %cst_52 = arith.constant dense<0.000000e+00> : vector<16xf32>
    %70 = vector.multi_reduction <add>, %69, %cst_52 [0] : vector<4x16xf32> to vector<16xf32>
    %71 = vector.shape_cast %70 : vector<16xf32> to vector<1x16xf32>
    %72 = arith.mulf %69, %69 : vector<4x16xf32>
    %cst_53 = arith.constant dense<0.000000e+00> : vector<16xf32>
    %73 = vector.multi_reduction <add>, %72, %cst_53 [0] : vector<4x16xf32> to vector<16xf32>
    %74 = vector.shape_cast %73 : vector<16xf32> to vector<1x16xf32>
    %cst_54 = arith.constant 2.500000e-01 : f32
    %75 = vector.broadcast %cst_54 : f32 to vector<1x16xf32>
    %76 = arith.mulf %71, %75 : vector<1x16xf32>
    %cst_55 = arith.constant 2.500000e-01 : f32
    %77 = vector.broadcast %cst_55 : f32 to vector<1x16xf32>
    %78 = arith.mulf %74, %77 : vector<1x16xf32>
    %79 = arith.mulf %76, %76 : vector<1x16xf32>
    %80 = arith.subf %78, %79 : vector<1x16xf32>
    %cst_56 = arith.constant 0.000000e+00 : f32
    %81 = vector.broadcast %cst_56 : f32 to vector<1x16xf32>
    %82 = arith.maximumf %80, %81 : vector<1x16xf32>
    %cst_57 = arith.constant 9.99999974E-6 : f32
    %83 = vector.broadcast %cst_57 : f32 to vector<1x16xf32>
    %84 = arith.addf %82, %83 : vector<1x16xf32>
    %85 = math.rsqrt %84 : vector<1x16xf32>
    %86 = vector.broadcast %76 : vector<1x16xf32> to vector<4x16xf32>
    %87 = arith.subf %69, %86 : vector<4x16xf32>
    %88 = vector.broadcast %85 : vector<1x16xf32> to vector<4x16xf32>
    %89 = arith.mulf %87, %88 : vector<4x16xf32>
    %90 = vector.extract_strided_slice %27 {offsets = [4, 0], sizes = [4, 1], strides = [1, 1]} : vector<12x1xf32> to vector<4x1xf32>
    %91 = vector.broadcast %90 : vector<4x1xf32> to vector<4x16xf32>
    %92 = arith.mulf %89, %91 : vector<4x16xf32>
    %93 = vector.extract_strided_slice %28 {offsets = [4, 0], sizes = [4, 1], strides = [1, 1]} : vector<12x1xf32> to vector<4x1xf32>
    %94 = vector.broadcast %93 : vector<4x1xf32> to vector<4x16xf32>
    %95 = arith.addf %92, %94 : vector<4x16xf32>
    %cst_58 = arith.constant 2.000000e+01 : f32
    %96 = vector.broadcast %cst_58 : f32 to vector<4x16xf32>
    %97 = arith.minimumf %95, %96 : vector<4x16xf32>
    %98 = math.exp %97 : vector<4x16xf32>
    %cst_59 = arith.constant 2.000000e+00 : f32
    %99 = vector.broadcast %cst_59 : f32 to vector<4x16xf32>
    %100 = arith.addf %98, %99 : vector<4x16xf32>
    %101 = arith.mulf %98, %100 : vector<4x16xf32>
    %cst_60 = arith.constant 2.000000e+00 : f32
    %102 = vector.broadcast %cst_60 : f32 to vector<4x16xf32>
    %103 = arith.addf %101, %102 : vector<4x16xf32>
    %104 = arith.divf %101, %103 : vector<4x16xf32>
    %105 = arith.mulf %95, %104 : vector<4x16xf32>
    %c0_61 = arith.constant 0 : index
    %c4_62 = arith.constant 4 : index
    %c0_63 = arith.constant 0 : index
    %106 = vector.load %arg7[%c0_61, %c4_62, %c0_63] : memref<1x12x16xf32, #tpu.memory_space<vmem>>, vector<1x4x16xf32>
    %107 = vector.shape_cast %106 : vector<1x4x16xf32> to vector<4x16xf32>
    %108 = vector.shape_cast %105 : vector<4x16xf32> to vector<1x4x16xf32>
    tpu.vector_store %arg7[%c0_61, %c4_62, %c0_63], %108 {strides = array<i32>} : memref<1x12x16xf32, #tpu.memory_space<vmem>>, vector<1x4x16xf32>,
    %109 = vector.extract_strided_slice %26 {offsets = [8, 0], sizes = [4, 16], strides = [1, 1]} : vector<12x16xf32> to vector<4x16xf32>
    %cst_64 = arith.constant dense<0.000000e+00> : vector<16xf32>
    %110 = vector.multi_reduction <add>, %109, %cst_64 [0] : vector<4x16xf32> to vector<16xf32>
    %111 = vector.shape_cast %110 : vector<16xf32> to vector<1x16xf32>
    %112 = arith.mulf %109, %109 : vector<4x16xf32>
    %cst_65 = arith.constant dense<0.000000e+00> : vector<16xf32>
    %113 = vector.multi_reduction <add>, %112, %cst_65 [0] : vector<4x16xf32> to vector<16xf32>
    %114 = vector.shape_cast %113 : vector<16xf32> to vector<1x16xf32>
    %cst_66 = arith.constant 2.500000e-01 : f32
    %115 = vector.broadcast %cst_66 : f32 to vector<1x16xf32>
    %116 = arith.mulf %111, %115 : vector<1x16xf32>
    %cst_67 = arith.constant 2.500000e-01 : f32
    %117 = vector.broadcast %cst_67 : f32 to vector<1x16xf32>
    %118 = arith.mulf %114, %117 : vector<1x16xf32>
    %119 = arith.mulf %116, %116 : vector<1x16xf32>
    %120 = arith.subf %118, %119 : vector<1x16xf32>
    %cst_68 = arith.constant 0.000000e+00 : f32
    %121 = vector.broadcast %cst_68 : f32 to vector<1x16xf32>
    %122 = arith.maximumf %120, %121 : vector<1x16xf32>
    %cst_69 = arith.constant 9.99999974E-6 : f32
    %123 = vector.broadcast %cst_69 : f32 to vector<1x16xf32>
    %124 = arith.addf %122, %123 : vector<1x16xf32>
    %125 = math.rsqrt %124 : vector<1x16xf32>
    %126 = vector.broadcast %116 : vector<1x16xf32> to vector<4x16xf32>
    %127 = arith.subf %109, %126 : vector<4x16xf32>
    %128 = vector.broadcast %125 : vector<1x16xf32> to vector<4x16xf32>
    %129 = arith.mulf %127, %128 : vector<4x16xf32>
    %130 = vector.extract_strided_slice %27 {offsets = [8, 0], sizes = [4, 1], strides = [1, 1]} : vector<12x1xf32> to vector<4x1xf32>
    %131 = vector.broadcast %130 : vector<4x1xf32> to vector<4x16xf32>
    %132 = arith.mulf %129, %131 : vector<4x16xf32>
    %133 = vector.extract_strided_slice %28 {offsets = [8, 0], sizes = [4, 1], strides = [1, 1]} : vector<12x1xf32> to vector<4x1xf32>
    %134 = vector.broadcast %133 : vector<4x1xf32> to vector<4x16xf32>
    %135 = arith.addf %132, %134 : vector<4x16xf32>
    %cst_70 = arith.constant 2.000000e+01 : f32
    %136 = vector.broadcast %cst_70 : f32 to vector<4x16xf32>
    %137 = arith.minimumf %135, %136 : vector<4x16xf32>
    %138 = math.exp %137 : vector<4x16xf32>
    %cst_71 = arith.constant 2.000000e+00 : f32
    %139 = vector.broadcast %cst_71 : f32 to vector<4x16xf32>
    %140 = arith.addf %138, %139 : vector<4x16xf32>
    %141 = arith.mulf %138, %140 : vector<4x16xf32>
    %cst_72 = arith.constant 2.000000e+00 : f32
    %142 = vector.broadcast %cst_72 : f32 to vector<4x16xf32>
    %143 = arith.addf %141, %142 : vector<4x16xf32>
    %144 = arith.divf %141, %143 : vector<4x16xf32>
    %145 = arith.mulf %135, %144 : vector<4x16xf32>
    %c0_73 = arith.constant 0 : index
    %c8_74 = arith.constant 8 : index
    %c0_75 = arith.constant 0 : index
    %146 = vector.load %arg7[%c0_73, %c8_74, %c0_75] : memref<1x12x16xf32, #tpu.memory_space<vmem>>, vector<1x4x16xf32>
    %147 = vector.shape_cast %146 : vector<1x4x16xf32> to vector<4x16xf32>
    %148 = vector.shape_cast %145 : vector<4x16xf32> to vector<1x4x16xf32>
    tpu.vector_store %arg7[%c0_73, %c8_74, %c0_75], %148 {strides = array<i32>} : memref<1x12x16xf32, #tpu.memory_space<vmem>>, vector<1x4x16xf32>,
    return
  }
  func.func @transform_0(%arg0: i32, %arg1: i32) -> (i32, i32, i32, i32) {
    %c0_i32 = arith.constant 0 : i32
    %c0_i32_0 = arith.constant 0 : i32
    %c0_i32_1 = arith.constant 0 : i32
    return %arg0, %arg1, %c0_i32, %c0_i32_0 : i32, i32, i32, i32
  }
  func.func @transform_1(%arg0: i32, %arg1: i32) -> (i32, i32) {
    %c0_i32 = arith.constant 0 : i32
    %c0_i32_0 = arith.constant 0 : i32
    %c0_i32_1 = arith.constant 0 : i32
    return %c0_i32, %c0_i32_0 : i32, i32
  }
  func.func @transform_2(%arg0: i32, %arg1: i32) -> (i32, i32) {
    %c0_i32 = arith.constant 0 : i32
    %c0_i32_0 = arith.constant 0 : i32
    %c0_i32_1 = arith.constant 0 : i32
    return %c0_i32, %c0_i32_0 : i32, i32
  }
  func.func @transform_3(%arg0: i32, %arg1: i32) -> (i32, i32) {
    %c0_i32 = arith.constant 0 : i32
    %c0_i32_0 = arith.constant 0 : i32
    %c0_i32_1 = arith.constant 0 : i32
    return %c0_i32, %c0_i32_0 : i32, i32
  }
  func.func @transform_4(%arg0: i32, %arg1: i32) -> (i32, i32) {
    %c0_i32 = arith.constant 0 : i32
    %c0_i32_0 = arith.constant 0 : i32
    %c0_i32_1 = arith.constant 0 : i32
    return %c0_i32, %c0_i32_0 : i32, i32
  }
  func.func @transform_5(%arg0: i32, %arg1: i32) -> (i32, i32, i32) {
    %c0_i32 = arith.constant 0 : i32
    %c0_i32_0 = arith.constant 0 : i32
    return %arg0, %c0_i32, %arg1 : i32, i32, i32
  }
}

</mosaic_0001>

<llo_original>
// kernel: tpu_custom_call.1
$region0: #{tpu_custom_call.1}
  #allocation0 [shape = 'u32[]', space=smem, size = 0x4, offset = 0x4, fixed_abs, tag = 'smem constant byte address 0x4 - core index']
  #allocation1 [shape = 'u32[144,128]{1,0:T(1,128)}', space=vmem, size = 0x12000, scoped, tag = 'internal scratch']
  #allocation2 [shape = 'f32[28,16]{1,0:T(8,128)}', space=vmem, size = 0x4000, scoped, tag = 'scratch operand']
  %s0 = inlined_call_operand.vmem [shape: f32[2,1,4,22], index: 0, kind: input, shape index: {}]
  %s1 = inlined_call_operand.vmem [shape: f32[12,28], index: 1, kind: input, shape index: {}]
  %s2 = inlined_call_operand.vmem [shape: f32[12,1], index: 2, kind: input, shape index: {}]
  %s3 = inlined_call_operand.vmem [shape: f32[12,1], index: 3, kind: input, shape index: {}]
  %s4 = inlined_call_operand.vmem [shape: f32[12,1], index: 4, kind: input, shape index: {}]
  %s5 = inlined_call_operand.vmem [shape: f32[2,12,16], index: 5, kind: output, shape index: {}]
  %s6 = sld [smem:[#allocation0]]
  $region53: #{tpu_custom_call.1} parent=0
    _
  %s8 = ssub.s32 1, %s6
  %s9 = scalar_select 0, %s8, %s6
  loop: start=0, step=1, limit=4
  $region2: #{tpu_custom_call.1} parent=0 // loop_pre_header
    _
  $region3: #{tpu_custom_call.1} parent=0 // loop_header
    %s11 = sphi 0, %s15
    %p12 = scmp.ge.s32.totalorder %s11, 4
    %s18 = sphi 0, %s30
    %s19 = sphi 0, %s26
    %s20 = sphi 0, %s18
    %s21 = sphi 0, %s19
    %s22 = sphi 0, %s20
    %s23 = sphi 0, %s21
    %s35 = sphi 0, %s37
    %s38 = sphi 0, %s35
    %s39 = sphi 0, %s38
    %s55 = sphi 0, %s39
    %s59 = sphi 0, %s59
    %s61 = sphi 0, %s59
    %s62 = sphi 0, %s61
    %s76 = sphi 0, %s62
    %s80 = sphi 0, %s80
    %s82 = sphi 0, %s80
    %s83 = sphi 0, %s82
    %s97 = sphi 0, %s83
    %s101 = sphi 0, %s101
    %s103 = sphi 0, %s101
    %s104 = sphi 0, %s103
    %s118 = sphi 0, %s104
    %s122 = sphi 0, %s122
    %s124 = sphi 0, %s122
    %s125 = sphi 0, %s124
    %s139 = sphi 0, %s125
    %s147 = sphi 0, %s149
    %s150 = sphi 0, %s147
    %s151 = sphi 0, %s150
    %s167 = sphi 0, %s151
  $region4: #{tpu_custom_call.1} parent=0 // loop_header_branch
    %14 = sbr.rel (%p12) target = $region8
  $region5: #{tpu_custom_call.1} parent=0 // loop_body
    %s16 = ssub.s32 %s11, 1
    %s17 = ssub.s32 %s11, 2
    %s24 = sadd.s32 1, %s19
    %p25 = scmp.ge.s32.totalorder %s24, 1
    %s26 = scalar_select %p25, 0, %s24
    %s27 = sadd.s32 1, %s18
    %s28 = scalar_select %p25, %s27, %s18
    %p29 = scmp.ge.s32.totalorder %s28, 2
    %s30 = scalar_select %p29, 0, %s28
    %s31 = ssub.s32 %s18, %s30
    %s32 = ssub.s32 %s19, %s26
    %s33 = sor.u32 %s31, %s32
    %p34 = scmp.eq.s32.totalorder %s33, 0
    %s36 = sadd.s32 %s35, 1
    %s37 = scalar_select %p34, %s35, %s36
    %p40 = pneg %p34
    %p41 = scmp.eq.s32.totalorder %s11, 1
    %p42 = por %p40, %p41
    %p43 = scmp.ne.s32.totalorder %s35, %s38
    %p44 = scmp.eq.s32.totalorder %s11, 0
    %p45 = por %p43, %p44
    %p46 = scmp.ne.s32.totalorder %s35, %s38
    %p47 = scmp.eq.s32.totalorder %s16, 1
    %p48 = por %p46, %p47
    %p49 = scmp.ne.s32.totalorder %s38, %s39
    %p50 = scmp.eq.s32.totalorder %s16, 0
    %p51 = por %p49, %p50
    %p52 = scmp.ne.s32.totalorder %s38, %s39
    %p53 = scmp.eq.s32.totalorder %s17, 1
    %p54 = por %p52, %p53
    %p56 = scmp.ne.s32.totalorder %s39, %s55
    %p57 = scmp.eq.s32.totalorder %s17, 0
    %p58 = por %p56, %p57
    %s60 = sadd.s32 %s59, 1
    %p63 = scmp.eq.s32.totalorder %s11, 1
    %p64 = scmp.ne.s32.totalorder %s59, %s61
    %p65 = scmp.eq.s32.totalorder %s11, 0
    %p66 = por %p64, %p65
    %p67 = scmp.ne.s32.totalorder %s59, %s61
    %p68 = scmp.eq.s32.totalorder %s16, 1
    %p69 = por %p67, %p68
    %p70 = scmp.ne.s32.totalorder %s61, %s62
    %p71 = scmp.eq.s32.totalorder %s16, 0
    %p72 = por %p70, %p71
    %p73 = scmp.ne.s32.totalorder %s61, %s62
    %p74 = scmp.eq.s32.totalorder %s17, 1
    %p75 = por %p73, %p74
    %p77 = scmp.ne.s32.totalorder %s62, %s76
    %p78 = scmp.eq.s32.totalorder %s17, 0
    %p79 = por %p77, %p78
    %s81 = sadd.s32 %s80, 1
    %p84 = scmp.eq.s32.totalorder %s11, 1
    %p85 = scmp.ne.s32.totalorder %s80, %s82
    %p86 = scmp.eq.s32.totalorder %s11, 0
    %p87 = por %p85, %p86
    %p88 = scmp.ne.s32.totalorder %s80, %s82
    %p89 = scmp.eq.s32.totalorder %s16, 1
    %p90 = por %p88, %p89
    %p91 = scmp.ne.s32.totalorder %s82, %s83
    %p92 = scmp.eq.s32.totalorder %s16, 0
    %p93 = por %p91, %p92
    %p94 = scmp.ne.s32.totalorder %s82, %s83
    %p95 = scmp.eq.s32.totalorder %s17, 1
    %p96 = por %p94, %p95
    %p98 = scmp.ne.s32.totalorder %s83, %s97
    %p99 = scmp.eq.s32.totalorder %s17, 0
    %p100 = por %p98, %p99
    %s102 = sadd.s32 %s101, 1
    %p105 = scmp.eq.s32.totalorder %s11, 1
    %p106 = scmp.ne.s32.totalorder %s101, %s103
    %p107 = scmp.eq.s32.totalorder %s11, 0
    %p108 = por %p106, %p107
    %p109 = scmp.ne.s32.totalorder %s101, %s103
    %p110 = scmp.eq.s32.totalorder %s16, 1
    %p111 = por %p109, %p110
    %p112 = scmp.ne.s32.totalorder %s103, %s104
    %p113 = scmp.eq.s32.totalorder %s16, 0
    %p114 = por %p112, %p113
    %p115 = scmp.ne.s32.totalorder %s103, %s104
    %p116 = scmp.eq.s32.totalorder %s17, 1
    %p117 = por %p115, %p116
    %p119 = scmp.ne.s32.totalorder %s104, %s118
    %p120 = scmp.eq.s32.totalorder %s17, 0
    %p121 = por %p119, %p120
    %s123 = sadd.s32 %s122, 1
    %p126 = scmp.eq.s32.totalorder %s11, 1
    %p127 = scmp.ne.s32.totalorder %s122, %s124
    %p128 = scmp.eq.s32.totalorder %s11, 0
    %p129 = por %p127, %p128
    %p130 = scmp.ne.s32.totalorder %s122, %s124
    %p131 = scmp.eq.s32.totalorder %s16, 1
    %p132 = por %p130, %p131
    %p133 = scmp.ne.s32.totalorder %s124, %s125
    %p134 = scmp.eq.s32.totalorder %s16, 0
    %p135 = por %p133, %p134
    %p136 = scmp.ne.s32.totalorder %s124, %s125
    %p137 = scmp.eq.s32.totalorder %s17, 1
    %p138 = por %p136, %p137
    %p140 = scmp.ne.s32.totalorder %s125, %s139
    %p141 = scmp.eq.s32.totalorder %s17, 0
    %p142 = por %p140, %p141
    %s143 = ssub.s32 %s18, %s30
    %s144 = ssub.s32 %s19, %s26
    %s145 = sor.u32 %s143, %s144
    %p146 = scmp.eq.s32.totalorder %s145, 0
    %s148 = sadd.s32 %s147, 1
    %s149 = scalar_select %p146, %s147, %s148
    %p152 = pneg %p146
    %p153 = scmp.eq.s32.totalorder %s11, 1
    %p154 = por %p152, %p153
    %p155 = scmp.ne.s32.totalorder %s147, %s150
    %p156 = scmp.eq.s32.totalorder %s11, 0
    %p157 = por %p155, %p156
    %p158 = scmp.ne.s32.totalorder %s147, %s150
    %p159 = scmp.eq.s32.totalorder %s16, 1
    %p160 = por %p158, %p159
    %p161 = scmp.ne.s32.totalorder %s150, %s151
    %p162 = scmp.eq.s32.totalorder %s16, 0
    %p163 = por %p161, %p162
    %p164 = scmp.ne.s32.totalorder %s150, %s151
    %p165 = scmp.eq.s32.totalorder %s17, 1
    %p166 = por %p164, %p165
    %p168 = scmp.ne.s32.totalorder %s151, %s167
    %p169 = scmp.eq.s32.totalorder %s17, 0
    %p170 = por %p168, %p169
    %p171 = scmp.le.s32.totalorder 1, %s11
    %p172 = scmp.lt.s32.totalorder %s11, 3
    %p173 = pnand %p171, %p172
    %p174 = pneg %p173
    // Predicated region
    $region9: #{tpu_custom_call.1} parent=5 // pred_check
      _
    $region10: #{tpu_custom_call.1} parent=5 // pred_check_branch
      %176 = sbr.rel (%p173) target = $region12
    $region11: #{tpu_custom_call.1} parent=5 // pred_region
      %s177 = ssub.s32 %s11, 1
      // Predicated region
      $region13: #{tpu_custom_call.1} parent=11 // pred_check
        %p178 = pneg %p72
      $region14: #{tpu_custom_call.1} parent=11 // pred_check_branch
        %180 = sbr.rel (%p178) target = $region16
      $region15: #{tpu_custom_call.1} parent=11 // pred_region
        _
      $region16: #{tpu_custom_call.1} parent=11 // pred_fallthru
        _
      // Predicated region
      $region17: #{tpu_custom_call.1} parent=11 // pred_check
        %p181 = pneg %p93
      $region18: #{tpu_custom_call.1} parent=11 // pred_check_branch
        %183 = sbr.rel (%p181) target = $region20
      $region19: #{tpu_custom_call.1} parent=11 // pred_region
        _
      $region20: #{tpu_custom_call.1} parent=11 // pred_fallthru
        _
      // Predicated region
      $region21: #{tpu_custom_call.1} parent=11 // pred_check
        %p184 = pneg %p114
      $region22: #{tpu_custom_call.1} parent=11 // pred_check_branch
        %186 = sbr.rel (%p184) target = $region24
      $region23: #{tpu_custom_call.1} parent=11 // pred_region
        _
      $region24: #{tpu_custom_call.1} parent=11 // pred_fallthru
        _
      // Predicated region
      $region25: #{tpu_custom_call.1} parent=11 // pred_check
        %p187 = pneg %p135
      $region26: #{tpu_custom_call.1} parent=11 // pred_check_branch
        %189 = sbr.rel (%p187) target = $region28
      $region27: #{tpu_custom_call.1} parent=11 // pred_region
        _
      $region28: #{tpu_custom_call.1} parent=11 // pred_fallthru
        _
    $region12: #{tpu_custom_call.1} parent=5 // pred_fallthru
      _
    %p190 = scmp.lt.s32.totalorder %s11, 2
    // Predicated region
    $region29: #{tpu_custom_call.1} parent=5 // pred_check
      %p191 = pneg %p190
    $region30: #{tpu_custom_call.1} parent=5 // pred_check_branch
      %193 = sbr.rel (%p191) target = $region32
    $region31: #{tpu_custom_call.1} parent=5 // pred_region
      // Predicated region
      $region33: #{tpu_custom_call.1} parent=31 // pred_check
        %p194 = pneg %p45
      $region34: #{tpu_custom_call.1} parent=31 // pred_check_branch
        %196 = sbr.rel (%p194) target = $region36
      $region35: #{tpu_custom_call.1} parent=31 // pred_region
        %p197 = scmp.lt.s32.totalorder %s18, 1
        %s198 = scalar_select %p197, %s18, 1
        %p199 = scmp.lt.s32.totalorder %s19, 0
        %s200 = scalar_select %p199, %s19, 0
        %s201 = sadd.s32 %s200, %s198
        %s202 = smul.addr %s201, 4
        %s203 = scalar_lea.vmem %s0, %s202
      $region36: #{tpu_custom_call.1} parent=31 // pred_fallthru
        _
    $region32: #{tpu_custom_call.1} parent=5 // pred_fallthru
      _
    %p204 = scmp.le.s32.totalorder 1, %s11
    %p205 = scmp.lt.s32.totalorder %s11, 3
    %p206 = pnand %p204, %p205
    %p207 = pneg %p206
    // Predicated region
    $region37: #{tpu_custom_call.1} parent=5 // pred_check
      _
    $region38: #{tpu_custom_call.1} parent=5 // pred_check_branch
      %209 = sbr.rel (%p206) target = $region40
    $region39: #{tpu_custom_call.1} parent=5 // pred_region
      %s210 = ssub.s32 %s11, 1
      %p211 = scmp.lt.s32.totalorder %s20, 1
      %s212 = scalar_select %p211, %s20, 1
      %p213 = scmp.lt.s32.totalorder %s21, 0
      %s214 = scalar_select %p213, %s21, 0
      %s215 = sadd.s32 %s214, %s212
      %s216 = smul.addr %s215, 4
      %s217 = scalar_lea.vmem %s0, %s216
      %p218 = pneg %p51
      %p219 = pneg %p48
      %p220 = pneg %p72
      %p221 = pneg %p69
      %p222 = pneg %p93
      %p223 = pneg %p90
      %p224 = pneg %p114
      %p225 = pneg %p111
      %p226 = pneg %p135
      %p227 = pneg %p132
      %p228 = pneg %p163
      %p229 = pneg %p160
      %p230 = scmp.lt.s32.totalorder %s20, 1
      %s231 = scalar_select %p230, %s20, 1
      %p232 = scmp.lt.s32.totalorder %s21, 0
      %s233 = scalar_select %p232, %s21, 0
      %s234 = smul.addr %s231, 2
      %s235 = sadd.s32 %s233, %s234
      %s236 = smul.addr %s235, 8
      %s237 = scalar_lea.vmem %s5, %s236
      %p238 = scmp.lt.s32.totalorder %s20, 1
      %s239 = scalar_select %p238, %s20, 1
      %p240 = scmp.lt.s32.totalorder %s21, 0
      %s241 = scalar_select %p240, %s21, 0
      %s242 = sadd.s32 %s241, %s239
      %s243 = smul.addr %s242, 4
      %s244 = scalar_lea.vmem %s0, %s243
      %p245 = scmp.lt.s32.totalorder %s20, 1
      %s246 = scalar_select %p245, %s20, 1
      %p247 = scmp.lt.s32.totalorder %s21, 0
      %s248 = scalar_select %p247, %s21, 0
      %s249 = smul.addr %s246, 2
      %s250 = sadd.s32 %s248, %s249
      %s251 = smul.addr %s250, 8
      %s252 = scalar_lea.vmem %s5, %s251
      %v253 = vld [vmem:[%s244] sm:$0xf]
      %vm254 = vcmask 125952
      %255 = vst.msk [vmem:[#allocation2] sm:$0xf] %vm254, %v253
      %v256 = vld [vmem:[%s244] sm:$0xf]
      %258 = vrot.lane.b32.xlu0 %v256, 127
      %v259 = vpop.permute.xlu0 %258
      %261 = vst.msk [vmem:[#allocation2 + $0x4] sm:$0xf] %vm254, %v259
      %v262 = vld [vmem:[%s244] sm:$0xf]
      %264 = vrot.lane.b32.xlu0 %v262, 126
      %v265 = vpop.permute.xlu0 %264
      %267 = vst.msk [vmem:[#allocation2 + $0x8] sm:$0xf] %vm254, %v265
      %v268 = vld [vmem:[%s244] sm:$0xf]
      %270 = vrot.lane.b32.xlu0 %v268, 125
      %v271 = vpop.permute.xlu0 %270
      %273 = vst.msk [vmem:[#allocation2 + $0xc] sm:$0xf] %vm254, %v271
      %v274 = vld [vmem:[%s244] sm:$0xf]
      %276 = vrot.lane.b32.xlu0 %v274, 124
      %v277 = vpop.permute.xlu0 %276
      %279 = vst.msk [vmem:[#allocation2 + $0x10] sm:$0xf] %vm254, %v277
      %v280 = vld [vmem:[%s244] sm:$0xf]
      %282 = vrot.lane.b32.xlu0 %v280, 123
      %v283 = vpop.permute.xlu0 %282
      %285 = vst.msk [vmem:[#allocation2 + $0x14] sm:$0xf] %vm254, %v283
      %v286 = vld [vmem:[%s244] sm:$0xf]
      %288 = vrot.lane.b32.xlu0 %v286, 122
      %v289 = vpop.permute.xlu0 %288
      %291 = vst.msk [vmem:[#allocation2 + $0x18] sm:$0xf] %vm254, %v289
      %v292 = vld [vmem:[%s1] sm:$0xff]
      %v293 = vld [vmem:[%s1 + $0x8] sm:$0xf]
      %v294 = vld [vmem:[#allocation2] sm:$0xff]
      %v295 = vld [vmem:[#allocation2 + $0x8] sm:$0xff]
      %v296 = vld [vmem:[#allocation2 + $0x10] sm:$0xff]
      %v297 = vld [vmem:[#allocation2 + $0x18] sm:$0xf]
      %v298 = vld [vmem:[%s2] sm:$0xff]
      %v299 = vld [vmem:[%s2 + $0x8] sm:$0xf]
      %301 = vset.pattern.permute.xlu0 0
      %302 = vperm.xlu0 %301, %v298
      %v303 = vpop.permute.xlu0 %302
      %306 = vset.pattern.permute.xlu0 0
      %307 = vperm.xlu0 %306, %v299
      %v308 = vpop.permute.xlu0 %307
      %vm310 = vcmask 228352
      %v312 = vsel %vm310, %v292, 0
      %v315 = vsel %vm310, %v293, 0
      %vm317 = vcmask 1043456
      %v319 = vsel %vm317, %v297, 0
      %321 = vmatprep.subr.mxu0 0.0
      %322 = vmatpush1.msra.mxu0 0.0
      %323 = vmatprep.subr.mxu0 0.0
      %324 = vmatpush1.msra.mxu0 0.0
      %325 = vmatprep.subr.mxu0 0.0
      %326 = vmatpush1.msra.mxu0 0.0
      %327 = vmatprep.subr.mxu0 0.0
      %328 = vmatpush1.msra.mxu0 0.0
      %329 = vmatprep.subr.mxu0 0.0
      %330 = vmatpush1.msra.mxu0 0.0
      %331 = vmatprep.subr.mxu0 0.0
      %332 = vmatpush1.msra.mxu0 0.0
      %333 = vmatprep.subr.mxu0 0.0
      %334 = vmatpush1.msra.mxu0 0.0
      %335 = vmatprep.subr.mxu0 0.0
      %336 = vmatpush1.msra.mxu0 0.0
      %337 = vmatprep.subr.mxu0 0.0
      %338 = vmatpush1.msra.mxu0 0.0
      %339 = vmatprep.subr.mxu0 0.0
      %340 = vmatpush1.msra.mxu0 0.0
      %341 = vmatprep.subr.mxu0 0.0
      %342 = vmatpush1.msra.mxu0 0.0
      %343 = vmatprep.subr.mxu0 0.0
      %344 = vmatpush1.msra.mxu0 0.0
      %345 = vmatprep.subr.mxu0 0.0
      %346 = vmatpush1.msra.mxu0 %v319
      %347 = vmatprep.subr.mxu0 0.0
      %348 = vmatpush1.msra.mxu0 %v296
      %349 = vmatprep.subr.mxu0 0.0
      %350 = vmatpush1.msra.mxu0 %v295
      %351 = vmatprep.subr.mxu0 0.0
      %352 = vmatpush1.msra.mxu0 %v294
      %353 = vmatprep.subr.mxu0 0.0
      %354 = vmatpush2.msra.mxu0 0.0
      %355 = vmatprep.subr.mxu0 0.0
      %356 = vmatpush2.msra.mxu0 0.0
      %357 = vmatprep.subr.mxu0 0.0
      %358 = vmatpush2.msra.mxu0 0.0
      %359 = vmatprep.subr.mxu0 0.0
      %360 = vmatpush2.msra.mxu0 0.0
      %361 = vmatprep.subr.mxu0 0.0
      %362 = vmatpush2.msra.mxu0 0.0
      %363 = vmatprep.subr.mxu0 0.0
      %364 = vmatpush2.msra.mxu0 0.0
      %365 = vmatprep.subr.mxu0 0.0
      %366 = vmatpush2.msra.mxu0 0.0
      %367 = vmatprep.subr.mxu0 0.0
      %368 = vmatpush2.msra.mxu0 0.0
      %369 = vmatprep.subr.mxu0 0.0
      %370 = vmatpush2.msra.mxu0 0.0
      %371 = vmatprep.subr.mxu0 0.0
      %372 = vmatpush2.msra.mxu0 0.0
      %373 = vmatprep.subr.mxu0 0.0
      %374 = vmatpush2.msra.mxu0 0.0
      %375 = vmatprep.subr.mxu0 0.0
      %376 = vmatpush2.msra.mxu0 0.0
      %377 = vmatprep.subr.mxu0 0.0
      %378 = vmatpush2.msra.mxu0 0.0
      %379 = vmatprep.subr.mxu0 0.0
      %380 = vmatpush2.msra.mxu0 0.0
      %381 = vmatprep.subr.mxu0 0.0
      %382 = vmatpush2.msra.mxu0 0.0
      %383 = vmatprep.subr.mxu0 0.0
      %384 = vmatpush2.msra.mxu0 0.0
      %385 = vmatprep.mubr.f32.mxu0 0.0
      %386 = vmatmul.mubr.f32.gmra.mxu0 %v312
      %v387 = vpop.f32.mrf.mxu0
      %v388 = vadd.f32 %v303, %v387
      %v389 = vpop.f32.mrf.mxu0
      %390 = vmatprep.mubr.f32.mxu0 0.0
      %391 = vmatmul.mubr.f32.gmra.mxu0 %v315
      %v392 = vpop.f32.mrf.mxu0
      %v393 = vadd.f32 %v308, %v392
      %v394 = vpop.f32.mrf.mxu0
      %395 = vdwg.mxu0
      %v396 = vld [vmem:[%s3] sm:$0xff]
      %v397 = vld [vmem:[%s3 + $0x8] sm:$0xf]
      %v398 = vld [vmem:[%s4] sm:$0xff]
      %v399 = vld [vmem:[%s4 + $0x8] sm:$0xf]
      %v400 = vsel %vm254, %v388, 0.0
      %v401 = vrot.slane %v400, 4
      %v402 = vadd.f32 %v400, %v401
      %v403 = vrot.slane %v402, 2
      %v404 = vadd.f32 %v402, %v403
      %v405 = vrot.slane %v404, 1
      %v406 = vadd.f32 %v404, %v405
      %v407 = vmul.f32 %v388, %v388
      %v408 = vsel %vm254, %v407, 0.0
      %v409 = vrot.slane %v408, 4
      %v410 = vadd.f32 %v408, %v409
      %v411 = vrot.slane %v410, 2
      %v412 = vadd.f32 %v410, %v411
      %v413 = vrot.slane %v412, 1
      %v414 = vadd.f32 %v412, %v413
      %v415 = vmul.f32 %v406, 0.25
      %v416 = vmul.f32 %v414, 0.25
      %v417 = vmul.f32 %v415, %v415
      %v418 = vsub.f32 %v416, %v417
      %v419 = vmax.f32 %v418, 0.0
      %v420 = vadd.f32 %v419, 1e-05
      %v421 = vrsqrt.pop %v420
      %v422 = vsub.f32 %v388, %v415
      %v423 = vmul.f32 %v422, %v421
      %425 = vset.pattern.permute.xlu0 0
      %426 = vperm.xlu0 %425, %v396
      %v427 = vpop.permute.xlu0 %426
      %v429 = vmul.f32 %v423, %v427
      %431 = vset.pattern.permute.xlu0 0
      %432 = vperm.xlu0 %431, %v398
      %v433 = vpop.permute.xlu0 %432
      %v435 = vadd.f32 %v429, %v433
      %v436 = vmin.f32 %v435, 20.0
      %v437 = vmul.f32 %v436, 1.442695
      %v438 = vpow.pop %v437
      %v439 = vadd.f32 %v438, 2.0
      %v440 = vmul.f32 %v438, %v439
      %v441 = vadd.f32 %v440, 2.0
      %v442 = vrcp.pop %v441
      %v443 = vmul.f32 %v440, %v442
      %v444 = vmul.f32 %v435, %v443
      %445 = vst.msk [vmem:[%s252] sm:$0xf] %vm254, %v444
      %v447 = vrot.slane %v388, 4
      %v449 = vsel %vm254, %v447, 0.0
      %v450 = vrot.slane %v449, 4
      %v451 = vadd.f32 %v449, %v450
      %v452 = vrot.slane %v451, 2
      %v453 = vadd.f32 %v451, %v452
      %v454 = vrot.slane %v453, 1
      %v455 = vadd.f32 %v453, %v454
      %v457 = vrot.slane %v407, 4
      %v459 = vsel %vm254, %v457, 0.0
      %v460 = vrot.slane %v459, 4
      %v461 = vadd.f32 %v459, %v460
      %v462 = vrot.slane %v461, 2
      %v463 = vadd.f32 %v461, %v462
      %v464 = vrot.slane %v463, 1
      %v465 = vadd.f32 %v463, %v464
      %v466 = vmul.f32 %v455, 0.25
      %v467 = vmul.f32 %v465, 0.25
      %v468 = vmul.f32 %v466, %v466
      %v469 = vsub.f32 %v467, %v468
      %v470 = vmax.f32 %v469, 0.0
      %v471 = vadd.f32 %v470, 1e-05
      %v472 = vrsqrt.pop %v471
      %v473 = vsub.f32 %v388, %v466
      %v474 = vmul.f32 %v473, %v472
      %v475 = vmul.f32 %v474, %v427
      %v476 = vadd.f32 %v475, %v433
      %v477 = vmin.f32 %v476, 20.0
      %v478 = vmul.f32 %v477, 1.442695
      %v479 = vpow.pop %v478
      %v480 = vadd.f32 %v479, 2.0
      %v481 = vmul.f32 %v479, %v480
      %v482 = vadd.f32 %v481, 2.0
      %v483 = vrcp.pop %v482
      %v484 = vmul.f32 %v481, %v483
      %v485 = vmul.f32 %v476, %v484
      %vm486 = vcmask 130052
      %487 = vst.msk [vmem:[%s252] sm:$0xf0] %vm486, %v485
      %v488 = vsel %vm254, %v393, 0.0
      %v489 = vrot.slane %v488, 4
      %v490 = vadd.f32 %v488, %v489
      %v491 = vrot.slane %v490, 2
      %v492 = vadd.f32 %v490, %v491
      %v493 = vrot.slane %v492, 1
      %v494 = vadd.f32 %v492, %v493
      %v495 = vmul.f32 %v393, %v393
      %v496 = vsel %vm254, %v495, 0.0
      %v497 = vrot.slane %v496, 4
      %v498 = vadd.f32 %v496, %v497
      %v499 = vrot.slane %v498, 2
      %v500 = vadd.f32 %v498, %v499
      %v501 = vrot.slane %v500, 1
      %v502 = vadd.f32 %v500, %v501
      %v503 = vmul.f32 %v494, 0.25
      %v504 = vmul.f32 %v502, 0.25
      %v505 = vmul.f32 %v503, %v503
      %v506 = vsub.f32 %v504, %v505
      %v507 = vmax.f32 %v506, 0.0
      %v508 = vadd.f32 %v507, 1e-05
      %v509 = vrsqrt.pop %v508
      %v510 = vsub.f32 %v393, %v503
      %v511 = vmul.f32 %v510, %v509
      %513 = vset.pattern.permute.xlu0 0
      %514 = vperm.xlu0 %513, %v397
      %v515 = vpop.permute.xlu0 %514
      %v517 = vmul.f32 %v511, %v515
      %519 = vset.pattern.permute.xlu0 0
      %520 = vperm.xlu0 %519, %v399
      %v521 = vpop.permute.xlu0 %520
      %v523 = vadd.f32 %v517, %v521
      %v524 = vmin.f32 %v523, 20.0
      %v525 = vmul.f32 %v524, 1.442695
      %v526 = vpow.pop %v525
      %v527 = vadd.f32 %v526, 2.0
      %v528 = vmul.f32 %v526, %v527
      %v529 = vadd.f32 %v528, 2.0
      %v530 = vrcp.pop %v529
      %v531 = vmul.f32 %v528, %v530
      %v532 = vmul.f32 %v523, %v531
      %533 = vst.msk [vmem:[%s252 + $0x8] sm:$0xf] %vm254, %v532
      %p534 = scmp.lt.s32.totalorder %s20, 1
      %s535 = scalar_select %p534, %s20, 1
      %p536 = scmp.lt.s32.totalorder %s21, 0
      %s537 = scalar_select %p536, %s21, 0
      %s538 = smul.addr %s535, 2
      %s539 = sadd.s32 %s537, %s538
      %s540 = smul.addr %s539, 8
      %s541 = scalar_lea.vmem %s5, %s540
      // Predicated region
      $region41: #{tpu_custom_call.1} parent=39 // pred_check
        %p542 = pneg %p160
      $region42: #{tpu_custom_call.1} parent=39 // pred_check_branch
        %544 = sbr.rel (%p542) target = $region44
      $region43: #{tpu_custom_call.1} parent=39 // pred_region
        _
      $region44: #{tpu_custom_call.1} parent=39 // pred_fallthru
        _
    $region40: #{tpu_custom_call.1} parent=5 // pred_fallthru
      _
    %p545 = scmp.le.s32.totalorder 2, %s11
    // Predicated region
    $region45: #{tpu_custom_call.1} parent=5 // pred_check
      %p546 = pneg %p545
    $region46: #{tpu_custom_call.1} parent=5 // pred_check_branch
      %548 = sbr.rel (%p546) target = $region48
    $region47: #{tpu_custom_call.1} parent=5 // pred_region
      %s549 = ssub.s32 %s11, 2
      // Predicated region
      $region49: #{tpu_custom_call.1} parent=47 // pred_check
        %p550 = pneg %p166
      $region50: #{tpu_custom_call.1} parent=47 // pred_check_branch
        %552 = sbr.rel (%p550) target = $region52
      $region51: #{tpu_custom_call.1} parent=47 // pred_region
        %p553 = scmp.lt.s32.totalorder %s22, 1
        %s554 = scalar_select %p553, %s22, 1
        %p555 = scmp.lt.s32.totalorder %s23, 0
        %s556 = scalar_select %p555, %s23, 0
        %s557 = smul.addr %s554, 2
        %s558 = sadd.s32 %s556, %s557
        %s559 = smul.addr %s558, 8
        %s560 = scalar_lea.vmem %s5, %s559
      $region52: #{tpu_custom_call.1} parent=47 // pred_fallthru
        _
    $region48: #{tpu_custom_call.1} parent=5 // pred_fallthru
      _
  $region6: #{tpu_custom_call.1} parent=0 // loop_footer
    %s15 = sadd.s32 1, %s11
  $region7: #{tpu_custom_call.1} parent=0 // loop_footer_branch
    %10 = sbr.rel target = $region3
  $region8: #{tpu_custom_call.1} parent=0 // loop_exit
    _

</llo_original>
